<compile_context>
chip_gen: v7x
topology: tpu7x:2x2x1
jax: 0.10.0
libtpu: 0.0.40
codegen_flags: <defaults>
</compile_context>

<pallas_src>
import jax
import jax.numpy as jnp
from jax.experimental import pallas as pl
from jax.experimental.pallas import tpu as pltpu


def _round_up(x, m):
    return ((x + m - 1) // m) * m


# ----------------------------- Pallas kernel --------------------------------
def _residual_layer_kernel(x_ref, w1_ref, b1_ref, w2_ref, b2_ref, o_ref):
    """y = relu(relu(x @ W1 + b1) @ W2 + b2) + x for one (tile_n, D) row tile.

    Matmul operands are fed to the MXU in the weight dtype (bf16 by default),
    accumulation is f32; bias add / relu / residual stay f32 on the VPU.
    """
    mxu_dtype = w1_ref.dtype
    x_f32 = x_ref[...].astype(jnp.float32)
    h = jnp.dot(x_ref[...].astype(mxu_dtype), w1_ref[...],
                preferred_element_type=jnp.float32) + b1_ref[...]
    h = jnp.maximum(h, 0.0)
    y = jnp.dot(h.astype(mxu_dtype), w2_ref[...],
                preferred_element_type=jnp.float32) + b2_ref[...]
    y = jnp.maximum(y, 0.0)
    o_ref[...] = (y + x_f32).astype(o_ref.dtype)


# --------------------------- tiling / call builder ---------------------------
_VMEM_BUDGET = 32 * 1024 * 1024   # conservative: fits v7x (64 MiB phys) with headroom
_MAX_TILE_N = 1024                # keeps >=2 grid steps (megacore) once N > 1024


def _choose_tile_n(n, d, x_itemsize, w_itemsize):
    """Largest row tile that fits the VMEM budget (weights assumed double-buffered)."""
    weight_bytes = 2 * (2 * d * d * w_itemsize + 2 * d * 4)
    avail = max(_VMEM_BUDGET - weight_bytes, 1 << 20)
    per_row = 4 * d * x_itemsize              # x tile + out tile, double-buffered each
    cap = max(avail // per_row, 8)
    tile = int(min(_MAX_TILE_N, cap, _round_up(n, 8)))
    if tile >= 256:
        tile = (tile // 128) * 128            # MXU row granularity when large
    return max((tile // 8) * 8, 8)


def _build_residual_call(n, d, tile_n, x_dtype, w_dtype, single_buffer_weights):
    grid = (pl.cdiv(n, tile_n),)

    if single_buffer_weights:
        def const_spec(shape):
            # Constant index_map -> weights stay resident; one buffer is enough.
            return pl.BlockSpec(shape, lambda i: (0, 0), pipeline_mode=pl.Buffered(1))
        w_nbuf = 1
    else:
        def const_spec(shape):
            return pl.BlockSpec(shape, lambda i: (0, 0))
        w_nbuf = 2

    x_itemsize = jnp.dtype(x_dtype).itemsize
    w_itemsize = jnp.dtype(w_dtype).itemsize
    est = (4 * tile_n * d * x_itemsize                       # x + out tiles, 2 bufs each
           + w_nbuf * (2 * d * d * w_itemsize + 2 * d * 4))  # weights + biases
    vmem_limit = int(min(max(2 * est, 16 << 20), 60 << 20))

    return pl.pallas_call(
        _residual_layer_kernel,
        out_shape=jax.ShapeDtypeStruct((n, d), x_dtype),
        grid_spec=pltpu.PrefetchScalarGridSpec(
            num_scalar_prefetch=0,
            grid=grid,
            in_specs=[
                pl.BlockSpec((tile_n, d), lambda i: (i, 0)),   # x rows (pipelined)
                const_spec((d, d)),                            # W1 (resident)
                const_spec((1, d)),                            # b1
                const_spec((d, d)),                            # W2 (resident)
                const_spec((1, d)),                            # b2
            ],
            out_specs=pl.BlockSpec((tile_n, d), lambda i: (i, 0)),
        ),
        compiler_params=pltpu.CompilerParams(
            dimension_semantics=("parallel",),
            vmem_limit_bytes=vmem_limit,
        ),
    )


_BUFFERED1_SUPPORTED = [None]   # lazily probed; fallback keeps the script runnable


def residual_layer_pallas(x, w1, b1, w2, b2, *, tile_n=None):
    """ResidualLayer forward: relu(lin2(relu(lin1(x)))) + x, rows tiled over grid."""
    n, d = x.shape
    if tile_n is None:
        tile_n = _choose_tile_n(n, d,
                                jnp.dtype(x.dtype).itemsize,
                                jnp.dtype(w1.dtype).itemsize)

    attempts = [True, False] if _BUFFERED1_SUPPORTED[0] is not False else [False]
    for single in attempts:
        try:
            out = _build_residual_call(n, d, tile_n, x.dtype, w1.dtype, single)(
                x, w1, b1, w2, b2)
            if single:
                _BUFFERED1_SUPPORTED[0] = True
            return out
        except Exception:
            if not single:
                raise
            _BUFFERED1_SUPPORTED[0] = False   # retry with default double buffering
    raise RuntimeError("residual_layer_pallas: unreachable")


# ----------------------------- Module wrapper --------------------------------
class StateEmbedding:
    """JAX/Pallas re-implementation of rank-hmms StateEmbedding.

    ResidualLayer (hmm-lm / compound-PCFG codebase):
        forward(x) = relu(lin2(relu(lin1(x)))) + x
    """

    def __init__(self, key, num_embeddings, embedding_dim,
                 num_embeddings1=None, num_embeddings2=None,
                 matmul_dtype=jnp.bfloat16):
        self.num_embeddings = num_embeddings
        self.embedding_dim = embedding_dim
        self.factored = num_embeddings1 is not None and num_embeddings2 is not None
        self.matmul_dtype = matmul_dtype
        ks = jax.random.split(key, 8)
        if not self.factored:
            # nn.Embedding init ~ N(0, 1)
            self.emb = jax.random.normal(ks[0], (num_embeddings, embedding_dim), jnp.float32)
        else:
            assert num_embeddings == num_embeddings1 * num_embeddings2
            self.num1, self.num2, self.num3 = num_embeddings1, num_embeddings2, num_embeddings
            self.dim1 = embedding_dim // 2
            self.dim3 = embedding_dim // 2
            self.emb1 = jax.random.normal(ks[0], (self.num1, self.dim1), jnp.float32)
            self.emb3 = jax.random.normal(ks[1], (self.num3, self.dim3), jnp.float32)
            d = embedding_dim
            bound = 1.0 / (d ** 0.5)  # nn.Linear default uniform init
            self.w1 = jax.random.uniform(ks[2], (d, d), jnp.float32, -bound, bound)
            self.b1 = jax.random.uniform(ks[3], (1, d), jnp.float32, -bound, bound)
            self.w2 = jax.random.uniform(ks[4], (d, d), jnp.float32, -bound, bound)
            self.b2 = jax.random.uniform(ks[5], (1, d), jnp.float32, -bound, bound)
            # Kernel-side weight copies in the MXU dtype (halves weight DMA bytes,
            # hits bf16 MXU peak on v6e/v7x). f32 masters kept for reference paths.
            self.w1_k = self.w1.astype(matmul_dtype)
            self.w2_k = self.w2.astype(matmul_dtype)

    # --- Pallas hot path -------------------------------------------------
    def _mlp(self, flat):
        return residual_layer_pallas(flat, self.w1_k, self.b1, self.w2_k, self.b2)

    # --- references ------------------------------------------------------
    def _mlp_ref(self, flat):
        # pure-JAX reference that mirrors the kernel's numerics (bf16 operands, f32 acc)
        wd = self.w1_k.dtype
        h = jnp.dot(flat.astype(wd), self.w1_k, preferred_element_type=jnp.float32) + self.b1
        h = jnp.maximum(h, 0.0)
        y = jnp.dot(h.astype(wd), self.w2_k, preferred_element_type=jnp.float32) + self.b2
        y = jnp.maximum(y, 0.0)
        return (y + flat.astype(jnp.float32)).astype(flat.dtype)

    def _mlp_ref_f32(self, flat):
        # full-precision reference matching the original PyTorch f32 semantics
        h = jnp.maximum(flat @ self.w1 + self.b1, 0.0)
        y = jnp.maximum(h @ self.w2 + self.b2, 0.0)
        return y + flat

    def _features(self, x):
        x1 = jnp.take(self.emb1, x // self.num2, axis=0)   # (..., dim1)
        x3 = jnp.take(self.emb3, x, axis=0)                # (..., dim3)
        return jnp.concatenate([x1, x3], axis=-1)          # (..., D)

    def _product_table(self):
        return jnp.concatenate(
            [
                jnp.broadcast_to(self.emb1[:, None, :], (self.num1, self.num2, self.dim1)),
                self.emb3.reshape(self.num1, self.num2, self.dim3),
            ],
            axis=-1,
        ).reshape(self.num3, self.embedding_dim)

    # --- forward ----------------------------------------------------------
    def __call__(self, x=None):
        if not self.factored:
            # Plain embedding lookup / weight return — a pure gather, no hot compute.
            return self.emb if x is None else jnp.take(self.emb, x, axis=0)

        if x is not None:
            feats = self._features(x)
            flat = feats.reshape(-1, self.embedding_dim)
            return self._mlp(flat).reshape(feats.shape)

        # x is None: full factored product table through the MLP kernel.
        return self._mlp(self._product_table())

    def reference(self, x=None, f32=False):
        if not self.factored:
            return self.emb if x is None else jnp.take(self.emb, x, axis=0)
        mlp = self._mlp_ref_f32 if f32 else self._mlp_ref
        if x is not None:
            feats = self._features(x)
            flat = feats.reshape(-1, self.embedding_dim)
            return mlp(flat).reshape(feats.shape)
        return mlp(self._product_table())


# ----------------------------------- main ------------------------------------
if __name__ == "__main__":
    key = jax.random.PRNGKey(0)
    k_params, k_idx, k_plain = jax.random.split(key, 3)

    # Factored: num_embeddings = num1 * num2 = 4 * 8 = 32 states, embedding_dim = 32.
    num1, num2, D = 4, 8, 32
    mod = StateEmbedding(k_params, num1 * num2, D, num_embeddings1=num1, num_embeddings2=num2)

    # Path 1: x = None → full (num3, D) state-embedding table through the Pallas MLP.
    out_all = jax.block_until_ready(mod(None))
    assert out_all.shape == (num1 * num2, D)
    ref_all = mod.reference(None)                      # kernel-matching numerics
    assert jnp.allclose(out_all, ref_all, atol=1e-4, rtol=1e-4)
    ref_all_f32 = mod.reference(None, f32=True)        # PyTorch f32 semantics
    assert jnp.allclose(out_all, ref_all_f32, atol=5e-2, rtol=5e-2)

    # Path 2: x = indices (batch=2, seq=8) → gathered factored embeddings through the MLP.
    idx = jax.random.randint(k_idx, (2, 8), 0, num1 * num2)
    out_idx = jax.block_until_ready(mod(idx))
    assert out_idx.shape == (2, 8, D)
    ref_idx = mod.reference(idx)
    assert jnp.allclose(out_idx, ref_idx, atol=1e-4, rtol=1e-4)
    ref_idx_f32 = mod.reference(idx, f32=True)
    assert jnp.allclose(out_idx, ref_idx_f32, atol=5e-2, rtol=5e-2)

    # Non-factored sanity check (pure gather path, JAX glue).
    mod_plain = StateEmbedding(k_plain, 16, D)
    w = jax.block_until_ready(mod_plain(None))
    g = jax.block_until_ready(mod_plain(jnp.array([0, 3, 15])))
    assert w.shape == (16, D) and g.shape == (3, D)

    print("KERNEL_OK")
</pallas_src>

<mosaic_0001>
module attributes {stable_mosaic.version = 11 : i64} {
  func.func @_residual_layer_kernel(%arg0: i32, %arg1: memref<32x32xf32, #tpu.memory_space<vmem>>, %arg2: memref<32x32xbf16, #tpu.memory_space<vmem>>, %arg3: memref<1x32xf32, #tpu.memory_space<vmem>>, %arg4: memref<32x32xbf16, #tpu.memory_space<vmem>>, %arg5: memref<1x32xf32, #tpu.memory_space<vmem>>, %arg6: memref<32x32xf32, #tpu.memory_space<vmem>>) attributes {dimension_semantics = [#tpu.dimension_semantics<parallel>], iteration_bounds = array<i64: 1>, scalar_prefetch = 0 : i64, scratch_operands = 0 : i64, tpu.core_type = #tpu.core_type<tc>, window_params = [{transform_indices = @transform_0, window_bounds = array<i64: 32, 32>}, {pipeline_mode = #tpu.pipeline_mode<synchronous>, transform_indices = @transform_1, window_bounds = array<i64: 32, 32>}, {pipeline_mode = #tpu.pipeline_mode<synchronous>, transform_indices = @transform_2, window_bounds = array<i64: 1, 32>}, {pipeline_mode = #tpu.pipeline_mode<synchronous>, transform_indices = @transform_3, window_bounds = array<i64: 32, 32>}, {pipeline_mode = #tpu.pipeline_mode<synchronous>, transform_indices = @transform_4, window_bounds = array<i64: 1, 32>}, {transform_indices = @transform_5, window_bounds = array<i64: 32, 32>}]} {
    %c0 = arith.constant 0 : index
    %c0_0 = arith.constant 0 : index
    %0 = vector.load %arg1[%c0, %c0_0] : memref<32x32xf32, #tpu.memory_space<vmem>>, vector<32x32xf32>
    %c0_1 = arith.constant 0 : index
    %c0_2 = arith.constant 0 : index
    %1 = vector.load %arg1[%c0_1, %c0_2] : memref<32x32xf32, #tpu.memory_space<vmem>>, vector<32x32xf32>
    %2 = arith.truncf %1 : vector<32x32xf32> to vector<32x32xbf16>
    %c0_3 = arith.constant 0 : index
    %c0_4 = arith.constant 0 : index
    %3 = vector.load %arg2[%c0_3, %c0_4] : memref<32x32xbf16, #tpu.memory_space<vmem>>, vector<32x32xbf16>
    %cst = arith.constant dense<0.000000e+00> : vector<32x32xf32>
    %4 = tpu.matmul %2, %3, %cst {dimension_numbers = #tpu.dot_dimension_numbers<[1], [0], [0], [1], [0, 0, 1, 1], [], []>} : vector<32x32xbf16>, vector<32x32xbf16>, vector<32x32xf32> -> vector<32x32xf32>
    %c0_5 = arith.constant 0 : index
    %c0_6 = arith.constant 0 : index
    %5 = vector.load %arg3[%c0_5, %c0_6] : memref<1x32xf32, #tpu.memory_space<vmem>>, vector<1x32xf32>
    %6 = vector.broadcast %5 : vector<1x32xf32> to vector<32x32xf32>
    %7 = arith.addf %4, %6 : vector<32x32xf32>
    %cst_7 = arith.constant 0.000000e+00 : f32
    %8 = vector.broadcast %cst_7 : f32 to vector<32x32xf32>
    %9 = arith.maximumf %7, %8 : vector<32x32xf32>
    %10 = arith.truncf %9 : vector<32x32xf32> to vector<32x32xbf16>
    %c0_8 = arith.constant 0 : index
    %c0_9 = arith.constant 0 : index
    %11 = vector.load %arg4[%c0_8, %c0_9] : memref<32x32xbf16, #tpu.memory_space<vmem>>, vector<32x32xbf16>
    %cst_10 = arith.constant dense<0.000000e+00> : vector<32x32xf32>
    %12 = tpu.matmul %10, %11, %cst_10 {dimension_numbers = #tpu.dot_dimension_numbers<[1], [0], [0], [1], [0, 0, 1, 1], [], []>} : vector<32x32xbf16>, vector<32x32xbf16>, vector<32x32xf32> -> vector<32x32xf32>
    %c0_11 = arith.constant 0 : index
    %c0_12 = arith.constant 0 : index
    %13 = vector.load %arg5[%c0_11, %c0_12] : memref<1x32xf32, #tpu.memory_space<vmem>>, vector<1x32xf32>
    %14 = vector.broadcast %13 : vector<1x32xf32> to vector<32x32xf32>
    %15 = arith.addf %12, %14 : vector<32x32xf32>
    %cst_13 = arith.constant 0.000000e+00 : f32
    %16 = vector.broadcast %cst_13 : f32 to vector<32x32xf32>
    %17 = arith.maximumf %15, %16 : vector<32x32xf32>
    %18 = arith.addf %17, %0 : vector<32x32xf32>
    %c0_14 = arith.constant 0 : index
    %c0_15 = arith.constant 0 : index
    %19 = vector.load %arg6[%c0_14, %c0_15] : memref<32x32xf32, #tpu.memory_space<vmem>>, vector<32x32xf32>
    tpu.vector_store %arg6[%c0_14, %c0_15], %18 {strides = array<i32>} : memref<32x32xf32, #tpu.memory_space<vmem>>, vector<32x32xf32>,
    return
  }
  func.func @transform_0(%arg0: i32) -> (i32, i32) {
    %c0_i32 = arith.constant 0 : i32
    %c0_i32_0 = arith.constant 0 : i32
    return %arg0, %c0_i32 : i32, i32
  }
  func.func @transform_1(%arg0: i32) -> (i32, i32) {
    %c0_i32 = arith.constant 0 : i32
    %c0_i32_0 = arith.constant 0 : i32
    %c0_i32_1 = arith.constant 0 : i32
    return %c0_i32, %c0_i32_0 : i32, i32
  }
  func.func @transform_2(%arg0: i32) -> (i32, i32) {
    %c0_i32 = arith.constant 0 : i32
    %c0_i32_0 = arith.constant 0 : i32
    %c0_i32_1 = arith.constant 0 : i32
    return %c0_i32, %c0_i32_0 : i32, i32
  }
  func.func @transform_3(%arg0: i32) -> (i32, i32) {
    %c0_i32 = arith.constant 0 : i32
    %c0_i32_0 = arith.constant 0 : i32
    %c0_i32_1 = arith.constant 0 : i32
    return %c0_i32, %c0_i32_0 : i32, i32
  }
  func.func @transform_4(%arg0: i32) -> (i32, i32) {
    %c0_i32 = arith.constant 0 : i32
    %c0_i32_0 = arith.constant 0 : i32
    %c0_i32_1 = arith.constant 0 : i32
    return %c0_i32, %c0_i32_0 : i32, i32
  }
  func.func @transform_5(%arg0: i32) -> (i32, i32) {
    %c0_i32 = arith.constant 0 : i32
    %c0_i32_0 = arith.constant 0 : i32
    return %arg0, %c0_i32 : i32, i32
  }
}

module attributes {stable_mosaic.version = 11 : i64} {
  func.func @_residual_layer_kernel(%arg0: i32, %arg1: memref<32x32xf32, #tpu.memory_space<vmem>>, %arg2: memref<32x32xbf16, #tpu.memory_space<vmem>>, %arg3: memref<1x32xf32, #tpu.memory_space<vmem>>, %arg4: memref<32x32xbf16, #tpu.memory_space<vmem>>, %arg5: memref<1x32xf32, #tpu.memory_space<vmem>>, %arg6: memref<32x32xf32, #tpu.memory_space<vmem>>) attributes {dimension_semantics = [#tpu.dimension_semantics<parallel>], iteration_bounds = array<i64: 1>, scalar_prefetch = 0 : i64, scratch_operands = 0 : i64, tpu.core_type = #tpu.core_type<tc>, window_params = [{transform_indices = @transform_0, window_bounds = array<i64: 32, 32>}, {pipeline_mode = #tpu.pipeline_mode<synchronous>, transform_indices = @transform_1, window_bounds = array<i64: 32, 32>}, {pipeline_mode = #tpu.pipeline_mode<synchronous>, transform_indices = @transform_2, window_bounds = array<i64: 1, 32>}, {pipeline_mode = #tpu.pipeline_mode<synchronous>, transform_indices = @transform_3, window_bounds = array<i64: 32, 32>}, {pipeline_mode = #tpu.pipeline_mode<synchronous>, transform_indices = @transform_4, window_bounds = array<i64: 1, 32>}, {transform_indices = @transform_5, window_bounds = array<i64: 32, 32>}]} {
    %c0 = arith.constant 0 : index
    %c0_0 = arith.constant 0 : index
    %0 = vector.load %arg1[%c0, %c0_0] : memref<32x32xf32, #tpu.memory_space<vmem>>, vector<32x32xf32>
    %c0_1 = arith.constant 0 : index
    %c0_2 = arith.constant 0 : index
    %1 = vector.load %arg1[%c0_1, %c0_2] : memref<32x32xf32, #tpu.memory_space<vmem>>, vector<32x32xf32>
    %2 = arith.truncf %1 : vector<32x32xf32> to vector<32x32xbf16>
    %c0_3 = arith.constant 0 : index
    %c0_4 = arith.constant 0 : index
    %3 = vector.load %arg2[%c0_3, %c0_4] : memref<32x32xbf16, #tpu.memory_space<vmem>>, vector<32x32xbf16>
    %cst = arith.constant dense<0.000000e+00> : vector<32x32xf32>
    %4 = tpu.matmul %2, %3, %cst {dimension_numbers = #tpu.dot_dimension_numbers<[1], [0], [0], [1], [0, 0, 1, 1], [], []>} : vector<32x32xbf16>, vector<32x32xbf16>, vector<32x32xf32> -> vector<32x32xf32>
    %c0_5 = arith.constant 0 : index
    %c0_6 = arith.constant 0 : index
    %5 = vector.load %arg3[%c0_5, %c0_6] : memref<1x32xf32, #tpu.memory_space<vmem>>, vector<1x32xf32>
    %6 = vector.broadcast %5 : vector<1x32xf32> to vector<32x32xf32>
    %7 = arith.addf %4, %6 : vector<32x32xf32>
    %cst_7 = arith.constant 0.000000e+00 : f32
    %8 = vector.broadcast %cst_7 : f32 to vector<32x32xf32>
    %9 = arith.maximumf %7, %8 : vector<32x32xf32>
    %10 = arith.truncf %9 : vector<32x32xf32> to vector<32x32xbf16>
    %c0_8 = arith.constant 0 : index
    %c0_9 = arith.constant 0 : index
    %11 = vector.load %arg4[%c0_8, %c0_9] : memref<32x32xbf16, #tpu.memory_space<vmem>>, vector<32x32xbf16>
    %cst_10 = arith.constant dense<0.000000e+00> : vector<32x32xf32>
    %12 = tpu.matmul %10, %11, %cst_10 {dimension_numbers = #tpu.dot_dimension_numbers<[1], [0], [0], [1], [0, 0, 1, 1], [], []>} : vector<32x32xbf16>, vector<32x32xbf16>, vector<32x32xf32> -> vector<32x32xf32>
    %c0_11 = arith.constant 0 : index
    %c0_12 = arith.constant 0 : index
    %13 = vector.load %arg5[%c0_11, %c0_12] : memref<1x32xf32, #tpu.memory_space<vmem>>, vector<1x32xf32>
    %14 = vector.broadcast %13 : vector<1x32xf32> to vector<32x32xf32>
    %15 = arith.addf %12, %14 : vector<32x32xf32>
    %cst_13 = arith.constant 0.000000e+00 : f32
    %16 = vector.broadcast %cst_13 : f32 to vector<32x32xf32>
    %17 = arith.maximumf %15, %16 : vector<32x32xf32>
    %18 = arith.addf %17, %0 : vector<32x32xf32>
    %c0_14 = arith.constant 0 : index
    %c0_15 = arith.constant 0 : index
    %19 = vector.load %arg6[%c0_14, %c0_15] : memref<32x32xf32, #tpu.memory_space<vmem>>, vector<32x32xf32>
    tpu.vector_store %arg6[%c0_14, %c0_15], %18 {strides = array<i32>} : memref<32x32xf32, #tpu.memory_space<vmem>>, vector<32x32xf32>,
    return
  }
  func.func @transform_0(%arg0: i32) -> (i32, i32) {
    %c0_i32 = arith.constant 0 : i32
    %c0_i32_0 = arith.constant 0 : i32
    return %arg0, %c0_i32 : i32, i32
  }
  func.func @transform_1(%arg0: i32) -> (i32, i32) {
    %c0_i32 = arith.constant 0 : i32
    %c0_i32_0 = arith.constant 0 : i32
    %c0_i32_1 = arith.constant 0 : i32
    return %c0_i32, %c0_i32_0 : i32, i32
  }
  func.func @transform_2(%arg0: i32) -> (i32, i32) {
    %c0_i32 = arith.constant 0 : i32
    %c0_i32_0 = arith.constant 0 : i32
    %c0_i32_1 = arith.constant 0 : i32
    return %c0_i32, %c0_i32_0 : i32, i32
  }
  func.func @transform_3(%arg0: i32) -> (i32, i32) {
    %c0_i32 = arith.constant 0 : i32
    %c0_i32_0 = arith.constant 0 : i32
    %c0_i32_1 = arith.constant 0 : i32
    return %c0_i32, %c0_i32_0 : i32, i32
  }
  func.func @transform_4(%arg0: i32) -> (i32, i32) {
    %c0_i32 = arith.constant 0 : i32
    %c0_i32_0 = arith.constant 0 : i32
    %c0_i32_1 = arith.constant 0 : i32
    return %c0_i32, %c0_i32_0 : i32, i32
  }
  func.func @transform_5(%arg0: i32) -> (i32, i32) {
    %c0_i32 = arith.constant 0 : i32
    %c0_i32_0 = arith.constant 0 : i32
    return %arg0, %c0_i32 : i32, i32
  }
}

</mosaic_0001>

<llo_original>
// kernel: tpu_custom_call.1
$region0: #{tpu_custom_call.1}
  #allocation0 [shape = 'u32[]', space=smem, size = 0x4, offset = 0x4, fixed_abs, tag = 'smem constant byte address 0x4 - core index']
  #allocation1 [shape = 'u32[144,128]{1,0:T(1,128)}', space=vmem, size = 0x12000, scoped, tag = 'internal scratch']
  %s0 = inlined_call_operand.hbm [shape: f32[32,32], index: 0, kind: input, shape index: {}]
  %s1 = inlined_call_operand.hbm [shape: bf16[32,32], index: 1, kind: input, shape index: {}]
  %s2 = inlined_call_operand.vmem [shape: f32[1,32], index: 2, kind: input, shape index: {}]
  %s3 = inlined_call_operand.hbm [shape: bf16[32,32], index: 3, kind: input, shape index: {}]
  %s4 = inlined_call_operand.vmem [shape: f32[1,32], index: 4, kind: input, shape index: {}]
  %s5 = inlined_call_operand.hbm [shape: f32[32,32], index: 5, kind: output, shape index: {}]
  %s6 = sld [smem:[#allocation0]]
  $region42: #{tpu_custom_call.1} parent=0
    _
  %s8 = ssub.s32 1, %s6
  %s9 = scalar_select 0, %s8, %s6
  $region1: #{tpu_custom_call.1} parent=0
    #allocation2 [shape = 'u8[16384]{0}', space=vmem, size = 0x4000, scoped, tag = 'input window, operand 0, single buffered']
    #allocation3 [shape = 's32[1]{0}', space=sflag, size = 0x4, scoped, tag = 'scoped memory for tpu_custom_call.1']
    #allocation4 [shape = 's32[1]{0}', space=sflag, size = 0x4, scoped, tag = 'scoped memory for tpu_custom_call.1']
    #allocation5 [shape = 'u8[8192]{0}', space=vmem, size = 0x2000, scoped, tag = 'input window, operand 1, single buffered']
    #allocation6 [shape = 's32[1]{0}', space=sflag, size = 0x4, scoped, tag = 'scoped memory for tpu_custom_call.1']
    #allocation7 [shape = 'u8[8192]{0}', space=vmem, size = 0x2000, scoped, tag = 'input window, operand 3, single buffered']
    #allocation8 [shape = 'u8[16384]{0}', space=vmem, size = 0x4000, scoped, tag = 'output window, operand 0, single buffered']
    %10 = vsyncpa [#allocation3], 0
    %11 = vsyncpa [#allocation6], 0
    %12 = vsyncpa [#allocation4], 0
    // Predicated region
    $region2: #{tpu_custom_call.1} parent=1 // pred_check
      _
    $region3: #{tpu_custom_call.1} parent=1 // pred_check_branch
      %14 = sbr.rel (0) target = $region5
    $region4: #{tpu_custom_call.1} parent=1 // pred_region
      %s16 = ssub.s32 512, 512
      %17 = vsyncadd [#allocation3], %s16
      %s18 = sshll.u32 [#allocation2], 4
      %s19 = int_to_ptr.vmem [resolvable:$true] %s18
      %24 = dma.hbm_to_vmem [thread:$0]  %s0, 512, %s19, [#allocation3], 128, 128, 8
    $region5: #{tpu_custom_call.1} parent=1 // pred_fallthru
      _
    // Predicated region
    $region6: #{tpu_custom_call.1} parent=1 // pred_check
      _
    $region7: #{tpu_custom_call.1} parent=1 // pred_check_branch
      %26 = sbr.rel (0) target = $region9
    $region8: #{tpu_custom_call.1} parent=1 // pred_region
      %s28 = ssub.s32 256, 256
      %29 = vsyncadd [#allocation6], %s28
      %s30 = sshll.u32 [#allocation5], 4
      %s31 = int_to_ptr.vmem [resolvable:$true] %s30
      %36 = dma.hbm_to_vmem [thread:$0]  %s1, 256, %s31, [#allocation6], 64, 64, 4
    $region9: #{tpu_custom_call.1} parent=1 // pred_fallthru
      _
    // Predicated region
    $region10: #{tpu_custom_call.1} parent=1 // pred_check
      _
    $region11: #{tpu_custom_call.1} parent=1 // pred_check_branch
      %38 = sbr.rel (0) target = $region13
    $region12: #{tpu_custom_call.1} parent=1 // pred_region
      _
    $region13: #{tpu_custom_call.1} parent=1 // pred_fallthru
      _
    // Predicated region
    $region14: #{tpu_custom_call.1} parent=1 // pred_check
      _
    $region15: #{tpu_custom_call.1} parent=1 // pred_check_branch
      %40 = sbr.rel (0) target = $region17
    $region16: #{tpu_custom_call.1} parent=1 // pred_region
      %s42 = ssub.s32 256, 256
      %43 = vsyncadd [#allocation6], %s42
      %s44 = sshll.u32 [#allocation7], 4
      %s45 = int_to_ptr.vmem [resolvable:$true] %s44
      %50 = dma.hbm_to_vmem [thread:$0]  %s3, 256, %s45, [#allocation6], 64, 64, 4
    $region17: #{tpu_custom_call.1} parent=1 // pred_fallthru
      _
    // Predicated region
    $region18: #{tpu_custom_call.1} parent=1 // pred_check
      _
    $region19: #{tpu_custom_call.1} parent=1 // pred_check_branch
      %52 = sbr.rel (0) target = $region21
    $region20: #{tpu_custom_call.1} parent=1 // pred_region
      _
    $region21: #{tpu_custom_call.1} parent=1 // pred_fallthru
      _
    // Predicated region
    $region22: #{tpu_custom_call.1} parent=1 // pred_check
      _
    $region23: #{tpu_custom_call.1} parent=1 // pred_check_branch
      %54 = sbr.rel (0) target = $region25
    $region24: #{tpu_custom_call.1} parent=1 // pred_region
      %55 = dma.done [#allocation3], 512
    $region25: #{tpu_custom_call.1} parent=1 // pred_fallthru
      _
    // Predicated region
    $region26: #{tpu_custom_call.1} parent=1 // pred_check
      _
    $region27: #{tpu_custom_call.1} parent=1 // pred_check_branch
      %57 = sbr.rel (0) target = $region29
    $region28: #{tpu_custom_call.1} parent=1 // pred_region
      %58 = dma.done [#allocation6], 256
    $region29: #{tpu_custom_call.1} parent=1 // pred_fallthru
      _
    // Predicated region
    $region30: #{tpu_custom_call.1} parent=1 // pred_check
      _
    $region31: #{tpu_custom_call.1} parent=1 // pred_check_branch
      %60 = sbr.rel (0) target = $region33
    $region32: #{tpu_custom_call.1} parent=1 // pred_region
      %61 = dma.done [#allocation6], 256
    $region33: #{tpu_custom_call.1} parent=1 // pred_fallthru
      _
    %v63 = vld [vmem:[#allocation2] sm:$0xff]
    %v64 = vld [vmem:[#allocation2 + $0x8] sm:$0xff]
    %v65 = vld [vmem:[#allocation2 + $0x10] sm:$0xff]
    %v66 = vld [vmem:[#allocation2 + $0x18] sm:$0xff]
    %v67 = vpack.c.bf16 %v64, %v63
    %v68 = vpack.c.bf16 %v66, %v65
    %v69 = vld [vmem:[#allocation5] sm:$0xf]
    %v70 = vld [vmem:[#allocation5 + $0x4] sm:$0xf]
    %v71 = vld [vmem:[#allocation5 + $0x8] sm:$0xf]
    %v72 = vld [vmem:[#allocation5 + $0xc] sm:$0xf]
    %v73 = vld [vmem:[%s2] sm:$0x1]
    %v75 = vlaneseq
    %v76 = vshrl.u32 %v75, 7
    %v77 = vsub.s32 0, %v76
    %v78 = vrot.slane %v73, %v77
    %v84 = vunpack.c.l.b16 %v69
    %v85 = vunpack.c.l.b16 %v70
    %v86 = vunpack.c.l.b16 %v71
    %v87 = vunpack.c.l.b16 %v72
    %v88 = vpack.c.b16 %v85, %v84
    %v89 = vpack.c.b16 %v87, %v86
    %vm92 = vcmask 261120
    %v94 = vsel %vm92, %v67, 0
    %v97 = vsel %vm92, %v68, 0
    %99 = vmatprep.subr.bf16.mxu0 0
    %100 = vmatpush1.bf16.msra.mxu0 %v88
    %101 = vmatprep.subr.bf16.mxu0 0
    %102 = vmatpush1.bf16.msra.mxu0 %v89
    %103 = vmatprep.subr.bf16.mxu0 0
    %104 = vmatpush1.bf16.msra.mxu0 0
    %105 = vmatprep.subr.bf16.mxu0 0
    %106 = vmatpush1.bf16.msra.mxu0 0
    %107 = vmatprep.subr.bf16.mxu0 0
    %108 = vmatpush1.bf16.msra.mxu0 0
    %109 = vmatprep.subr.bf16.mxu0 0
    %110 = vmatpush1.bf16.msra.mxu0 0
    %111 = vmatprep.subr.bf16.mxu0 0
    %112 = vmatpush1.bf16.msra.mxu0 0
    %113 = vmatprep.subr.bf16.mxu0 0
    %114 = vmatpush1.bf16.msra.mxu0 0
    %115 = vmatprep.subr.bf16.mxu0 0
    %116 = vmatpush1.bf16.msra.mxu0 0
    %117 = vmatprep.subr.bf16.mxu0 0
    %118 = vmatpush1.bf16.msra.mxu0 0
    %119 = vmatprep.subr.bf16.mxu0 0
    %120 = vmatpush1.bf16.msra.mxu0 0
    %121 = vmatprep.subr.bf16.mxu0 0
    %122 = vmatpush1.bf16.msra.mxu0 0
    %123 = vmatprep.subr.bf16.mxu0 0
    %124 = vmatpush1.bf16.msra.mxu0 0
    %125 = vmatprep.subr.bf16.mxu0 0
    %126 = vmatpush1.bf16.msra.mxu0 0
    %127 = vmatprep.subr.bf16.mxu0 0
    %128 = vmatpush1.bf16.msra.mxu0 0
    %129 = vmatprep.subr.bf16.mxu0 0
    %130 = vmatpush1.bf16.msra.mxu0 0
    %131 = vmatprep.mubr.bf16.mxu0 0
    %132 = vmatmul.mubr.bf16.gmra.mrb[0].mxu0 %v94
    %v133 = vpop.f32.mrb[0].mxu0
    %v134 = vadd.f32 %v78, %v133
    %v135 = vpop.f32.mrb[0].mxu0
    %v136 = vpop.f32.mrb[0].mxu0
    %v137 = vadd.f32 %v78, %v136
    %v138 = vpop.f32.mrb[0].mxu0
    %139 = vmatprep.mubr.bf16.mxu0 0
    %140 = vmatmul.mubr.bf16.gmra.mrb[0].mxu0 %v97
    %v141 = vpop.f32.mrb[0].mxu0
    %v142 = vadd.f32 %v78, %v141
    %v143 = vpop.f32.mrb[0].mxu0
    %v144 = vpop.f32.mrb[0].mxu0
    %v145 = vadd.f32 %v78, %v144
    %v146 = vpop.f32.mrb[0].mxu0
    %147 = vdwg.mxu0
    %v148 = vmax.f32 %v134, 0.0
    %v149 = vmax.f32 %v137, 0.0
    %v150 = vmax.f32 %v142, 0.0
    %v151 = vmax.f32 %v145, 0.0
    %v152 = vpack.c.bf16 %v149, %v148
    %v153 = vpack.c.bf16 %v151, %v150
    %v154 = vld [vmem:[#allocation7] sm:$0xf]
    %v155 = vld [vmem:[#allocation7 + $0x4] sm:$0xf]
    %v156 = vld [vmem:[#allocation7 + $0x8] sm:$0xf]
    %v157 = vld [vmem:[#allocation7 + $0xc] sm:$0xf]
    %v158 = vld [vmem:[%s4] sm:$0x1]
    %v160 = vlaneseq
    %v161 = vshrl.u32 %v160, 7
    %v162 = vsub.s32 0, %v161
    %v163 = vrot.slane %v158, %v162
    %v169 = vunpack.c.l.b16 %v154
    %v170 = vunpack.c.l.b16 %v155
    %v171 = vunpack.c.l.b16 %v156
    %v172 = vunpack.c.l.b16 %v157
    %v173 = vpack.c.b16 %v170, %v169
    %v174 = vpack.c.b16 %v172, %v171
    %v178 = vsel %vm92, %v152, 0
    %v181 = vsel %vm92, %v153, 0
    %183 = vmatprep.subr.bf16.mxu0 0
    %184 = vmatpush1.bf16.msra.mxu0 %v173
    %185 = vmatprep.subr.bf16.mxu0 0
    %186 = vmatpush1.bf16.msra.mxu0 %v174
    %187 = vmatprep.subr.bf16.mxu0 0
    %188 = vmatpush1.bf16.msra.mxu0 0
    %189 = vmatprep.subr.bf16.mxu0 0
    %190 = vmatpush1.bf16.msra.mxu0 0
    %191 = vmatprep.subr.bf16.mxu0 0
    %192 = vmatpush1.bf16.msra.mxu0 0
    %193 = vmatprep.subr.bf16.mxu0 0
    %194 = vmatpush1.bf16.msra.mxu0 0
    %195 = vmatprep.subr.bf16.mxu0 0
    %196 = vmatpush1.bf16.msra.mxu0 0
    %197 = vmatprep.subr.bf16.mxu0 0
    %198 = vmatpush1.bf16.msra.mxu0 0
    %199 = vmatprep.subr.bf16.mxu0 0
    %200 = vmatpush1.bf16.msra.mxu0 0
    %201 = vmatprep.subr.bf16.mxu0 0
    %202 = vmatpush1.bf16.msra.mxu0 0
    %203 = vmatprep.subr.bf16.mxu0 0
    %204 = vmatpush1.bf16.msra.mxu0 0
    %205 = vmatprep.subr.bf16.mxu0 0
    %206 = vmatpush1.bf16.msra.mxu0 0
    %207 = vmatprep.subr.bf16.mxu0 0
    %208 = vmatpush1.bf16.msra.mxu0 0
    %209 = vmatprep.subr.bf16.mxu0 0
    %210 = vmatpush1.bf16.msra.mxu0 0
    %211 = vmatprep.subr.bf16.mxu0 0
    %212 = vmatpush1.bf16.msra.mxu0 0
    %213 = vmatprep.subr.bf16.mxu0 0
    %214 = vmatpush1.bf16.msra.mxu0 0
    %215 = vmatprep.mubr.bf16.mxu0 0
    %216 = vmatmul.mubr.bf16.gmra.mrb[0].mxu0 %v178
    %v217 = vpop.f32.mrb[0].mxu0
    %v218 = vadd.f32 %v163, %v217
    %v219 = vpop.f32.mrb[0].mxu0
    %v220 = vpop.f32.mrb[0].mxu0
    %v221 = vadd.f32 %v163, %v220
    %v222 = vpop.f32.mrb[0].mxu0
    %223 = vmatprep.mubr.bf16.mxu0 0
    %224 = vmatmul.mubr.bf16.gmra.mrb[0].mxu0 %v181
    %v225 = vpop.f32.mrb[0].mxu0
    %v226 = vadd.f32 %v163, %v225
    %v227 = vpop.f32.mrb[0].mxu0
    %v228 = vpop.f32.mrb[0].mxu0
    %v229 = vadd.f32 %v163, %v228
    %v230 = vpop.f32.mrb[0].mxu0
    %231 = vdwg.mxu0
    %v232 = vmax.f32 %v218, 0.0
    %v233 = vmax.f32 %v221, 0.0
    %v234 = vmax.f32 %v226, 0.0
    %v235 = vmax.f32 %v229, 0.0
    %v236 = vadd.f32 %v232, %v63
    %v237 = vadd.f32 %v233, %v64
    %v238 = vadd.f32 %v234, %v65
    %v239 = vadd.f32 %v235, %v66
    %240 = vst.msk [vmem:[#allocation8] sm:$0xff] %vm92, %v236
    %241 = vst.msk [vmem:[#allocation8 + $0x8] sm:$0xff] %vm92, %v237
    %242 = vst.msk [vmem:[#allocation8 + $0x10] sm:$0xff] %vm92, %v238
    %243 = vst.msk [vmem:[#allocation8 + $0x18] sm:$0xff] %vm92, %v239
    // Predicated region
    $region34: #{tpu_custom_call.1} parent=1 // pred_check
      _
    $region35: #{tpu_custom_call.1} parent=1 // pred_check_branch
      %245 = sbr.rel (0) target = $region37
    $region36: #{tpu_custom_call.1} parent=1 // pred_region
      %s247 = ssub.s32 512, 512
      %248 = vsyncadd [#allocation4], %s247
      %s249 = sshll.u32 [#allocation8], 4
      %s250 = int_to_ptr.vmem [resolvable:$true] %s249
      %255 = dma.vmem_to_hbm [thread:$0]  %s250, 512, %s5, [#allocation4], 128, 128, 8
    $region37: #{tpu_custom_call.1} parent=1 // pred_fallthru
      _
    // Predicated region
    $region38: #{tpu_custom_call.1} parent=1 // pred_check
      _
    $region39: #{tpu_custom_call.1} parent=1 // pred_check_branch
      %257 = sbr.rel (0) target = $region41
    $region40: #{tpu_custom_call.1} parent=1 // pred_region
      %258 = dma.done [#allocation4], 512
    $region41: #{tpu_custom_call.1} parent=1 // pred_fallthru
      _
    %259 = vsyncpa [#allocation3], 1
    %260 = vsyncpa [#allocation6], 1
    %261 = vsyncpa [#allocation4], 1

// kernel: tpu_custom_call.1
$region0: #{tpu_custom_call.1}
  #allocation0 [shape = 'u32[]', space=smem, size = 0x4, offset = 0x4, fixed_abs, tag = 'smem constant byte address 0x4 - core index']
  #allocation1 [shape = 'u32[144,128]{1,0:T(1,128)}', space=vmem, size = 0x12000, scoped, tag = 'internal scratch']
  %s0 = inlined_call_operand.hbm [shape: f32[32,32], index: 0, kind: input, shape index: {}]
  %s1 = inlined_call_operand.hbm [shape: bf16[32,32], index: 1, kind: input, shape index: {}]
  %s2 = inlined_call_operand.vmem [shape: f32[1,32], index: 2, kind: input, shape index: {}]
  %s3 = inlined_call_operand.hbm [shape: bf16[32,32], index: 3, kind: input, shape index: {}]
  %s4 = inlined_call_operand.vmem [shape: f32[1,32], index: 4, kind: input, shape index: {}]
  %s5 = inlined_call_operand.hbm [shape: f32[32,32], index: 5, kind: output, shape index: {}]
  %s6 = sld [smem:[#allocation0]]
  $region42: #{tpu_custom_call.1} parent=0
    _
  %s8 = ssub.s32 1, %s6
  %s9 = scalar_select 0, %s8, %s6
  $region1: #{tpu_custom_call.1} parent=0
    #allocation2 [shape = 'u8[16384]{0}', space=vmem, size = 0x4000, scoped, tag = 'input window, operand 0, single buffered']
    #allocation3 [shape = 's32[1]{0}', space=sflag, size = 0x4, scoped, tag = 'scoped memory for tpu_custom_call.1']
    #allocation4 [shape = 's32[1]{0}', space=sflag, size = 0x4, scoped, tag = 'scoped memory for tpu_custom_call.1']
    #allocation5 [shape = 'u8[8192]{0}', space=vmem, size = 0x2000, scoped, tag = 'input window, operand 1, single buffered']
    #allocation6 [shape = 's32[1]{0}', space=sflag, size = 0x4, scoped, tag = 'scoped memory for tpu_custom_call.1']
    #allocation7 [shape = 'u8[8192]{0}', space=vmem, size = 0x2000, scoped, tag = 'input window, operand 3, single buffered']
    #allocation8 [shape = 'u8[16384]{0}', space=vmem, size = 0x4000, scoped, tag = 'output window, operand 0, single buffered']
    %10 = vsyncpa [#allocation3], 0
    %11 = vsyncpa [#allocation6], 0
    %12 = vsyncpa [#allocation4], 0
    // Predicated region
    $region2: #{tpu_custom_call.1} parent=1 // pred_check
      _
    $region3: #{tpu_custom_call.1} parent=1 // pred_check_branch
      %14 = sbr.rel (0) target = $region5
    $region4: #{tpu_custom_call.1} parent=1 // pred_region
      %s16 = ssub.s32 512, 512
      %17 = vsyncadd [#allocation3], %s16
      %s18 = sshll.u32 [#allocation2], 4
      %s19 = int_to_ptr.vmem [resolvable:$true] %s18
      %24 = dma.hbm_to_vmem [thread:$0]  %s0, 512, %s19, [#allocation3], 128, 128, 8
    $region5: #{tpu_custom_call.1} parent=1 // pred_fallthru
      _
    // Predicated region
    $region6: #{tpu_custom_call.1} parent=1 // pred_check
      _
    $region7: #{tpu_custom_call.1} parent=1 // pred_check_branch
      %26 = sbr.rel (0) target = $region9
    $region8: #{tpu_custom_call.1} parent=1 // pred_region
      %s28 = ssub.s32 256, 256
      %29 = vsyncadd [#allocation6], %s28
      %s30 = sshll.u32 [#allocation5], 4
      %s31 = int_to_ptr.vmem [resolvable:$true] %s30
      %36 = dma.hbm_to_vmem [thread:$0]  %s1, 256, %s31, [#allocation6], 64, 64, 4
    $region9: #{tpu_custom_call.1} parent=1 // pred_fallthru
      _
    // Predicated region
    $region10: #{tpu_custom_call.1} parent=1 // pred_check
      _
    $region11: #{tpu_custom_call.1} parent=1 // pred_check_branch
      %38 = sbr.rel (0) target = $region13
    $region12: #{tpu_custom_call.1} parent=1 // pred_region
      _
    $region13: #{tpu_custom_call.1} parent=1 // pred_fallthru
      _
    // Predicated region
    $region14: #{tpu_custom_call.1} parent=1 // pred_check
      _
    $region15: #{tpu_custom_call.1} parent=1 // pred_check_branch
      %40 = sbr.rel (0) target = $region17
    $region16: #{tpu_custom_call.1} parent=1 // pred_region
      %s42 = ssub.s32 256, 256
      %43 = vsyncadd [#allocation6], %s42
      %s44 = sshll.u32 [#allocation7], 4
      %s45 = int_to_ptr.vmem [resolvable:$true] %s44
      %50 = dma.hbm_to_vmem [thread:$0]  %s3, 256, %s45, [#allocation6], 64, 64, 4
    $region17: #{tpu_custom_call.1} parent=1 // pred_fallthru
      _
    // Predicated region
    $region18: #{tpu_custom_call.1} parent=1 // pred_check
      _
    $region19: #{tpu_custom_call.1} parent=1 // pred_check_branch
      %52 = sbr.rel (0) target = $region21
    $region20: #{tpu_custom_call.1} parent=1 // pred_region
      _
    $region21: #{tpu_custom_call.1} parent=1 // pred_fallthru
      _
    // Predicated region
    $region22: #{tpu_custom_call.1} parent=1 // pred_check
      _
    $region23: #{tpu_custom_call.1} parent=1 // pred_check_branch
      %54 = sbr.rel (0) target = $region25
    $region24: #{tpu_custom_call.1} parent=1 // pred_region
      %55 = dma.done [#allocation3], 512
    $region25: #{tpu_custom_call.1} parent=1 // pred_fallthru
      _
    // Predicated region
    $region26: #{tpu_custom_call.1} parent=1 // pred_check
      _
    $region27: #{tpu_custom_call.1} parent=1 // pred_check_branch
      %57 = sbr.rel (0) target = $region29
    $region28: #{tpu_custom_call.1} parent=1 // pred_region
      %58 = dma.done [#allocation6], 256
    $region29: #{tpu_custom_call.1} parent=1 // pred_fallthru
      _
    // Predicated region
    $region30: #{tpu_custom_call.1} parent=1 // pred_check
      _
    $region31: #{tpu_custom_call.1} parent=1 // pred_check_branch
      %60 = sbr.rel (0) target = $region33
    $region32: #{tpu_custom_call.1} parent=1 // pred_region
      %61 = dma.done [#allocation6], 256
    $region33: #{tpu_custom_call.1} parent=1 // pred_fallthru
      _
    %v63 = vld [vmem:[#allocation2] sm:$0xff]
    %v64 = vld [vmem:[#allocation2 + $0x8] sm:$0xff]
    %v65 = vld [vmem:[#allocation2 + $0x10] sm:$0xff]
    %v66 = vld [vmem:[#allocation2 + $0x18] sm:$0xff]
    %v67 = vpack.c.bf16 %v64, %v63
    %v68 = vpack.c.bf16 %v66, %v65
    %v69 = vld [vmem:[#allocation5] sm:$0xf]
    %v70 = vld [vmem:[#allocation5 + $0x4] sm:$0xf]
    %v71 = vld [vmem:[#allocation5 + $0x8] sm:$0xf]
    %v72 = vld [vmem:[#allocation5 + $0xc] sm:$0xf]
    %v73 = vld [vmem:[%s2] sm:$0x1]
    %v75 = vlaneseq
    %v76 = vshrl.u32 %v75, 7
    %v77 = vsub.s32 0, %v76
    %v78 = vrot.slane %v73, %v77
    %v84 = vunpack.c.l.b16 %v69
    %v85 = vunpack.c.l.b16 %v70
    %v86 = vunpack.c.l.b16 %v71
    %v87 = vunpack.c.l.b16 %v72
    %v88 = vpack.c.b16 %v85, %v84
    %v89 = vpack.c.b16 %v87, %v86
    %vm92 = vcmask 261120
    %v94 = vsel %vm92, %v67, 0
    %v97 = vsel %vm92, %v68, 0
    %99 = vmatprep.subr.bf16.mxu0 0
    %100 = vmatpush1.bf16.msra.mxu0 %v88
    %101 = vmatprep.subr.bf16.mxu0 0
    %102 = vmatpush1.bf16.msra.mxu0 %v89
    %103 = vmatprep.subr.bf16.mxu0 0
    %104 = vmatpush1.bf16.msra.mxu0 0
    %105 = vmatprep.subr.bf16.mxu0 0
    %106 = vmatpush1.bf16.msra.mxu0 0
    %107 = vmatprep.subr.bf16.mxu0 0
    %108 = vmatpush1.bf16.msra.mxu0 0
    %109 = vmatprep.subr.bf16.mxu0 0
    %110 = vmatpush1.bf16.msra.mxu0 0
    %111 = vmatprep.subr.bf16.mxu0 0
    %112 = vmatpush1.bf16.msra.mxu0 0
    %113 = vmatprep.subr.bf16.mxu0 0
    %114 = vmatpush1.bf16.msra.mxu0 0
    %115 = vmatprep.subr.bf16.mxu0 0
    %116 = vmatpush1.bf16.msra.mxu0 0
    %117 = vmatprep.subr.bf16.mxu0 0
    %118 = vmatpush1.bf16.msra.mxu0 0
    %119 = vmatprep.subr.bf16.mxu0 0
    %120 = vmatpush1.bf16.msra.mxu0 0
    %121 = vmatprep.subr.bf16.mxu0 0
    %122 = vmatpush1.bf16.msra.mxu0 0
    %123 = vmatprep.subr.bf16.mxu0 0
    %124 = vmatpush1.bf16.msra.mxu0 0
    %125 = vmatprep.subr.bf16.mxu0 0
    %126 = vmatpush1.bf16.msra.mxu0 0
    %127 = vmatprep.subr.bf16.mxu0 0
    %128 = vmatpush1.bf16.msra.mxu0 0
    %129 = vmatprep.subr.bf16.mxu0 0
    %130 = vmatpush1.bf16.msra.mxu0 0
    %131 = vmatprep.mubr.bf16.mxu0 0
    %132 = vmatmul.mubr.bf16.gmra.mrb[0].mxu0 %v94
    %v133 = vpop.f32.mrb[0].mxu0
    %v134 = vadd.f32 %v78, %v133
    %v135 = vpop.f32.mrb[0].mxu0
    %v136 = vpop.f32.mrb[0].mxu0
    %v137 = vadd.f32 %v78, %v136
    %v138 = vpop.f32.mrb[0].mxu0
    %139 = vmatprep.mubr.bf16.mxu0 0
    %140 = vmatmul.mubr.bf16.gmra.mrb[0].mxu0 %v97
    %v141 = vpop.f32.mrb[0].mxu0
    %v142 = vadd.f32 %v78, %v141
    %v143 = vpop.f32.mrb[0].mxu0
    %v144 = vpop.f32.mrb[0].mxu0
    %v145 = vadd.f32 %v78, %v144
    %v146 = vpop.f32.mrb[0].mxu0
    %147 = vdwg.mxu0
    %v148 = vmax.f32 %v134, 0.0
    %v149 = vmax.f32 %v137, 0.0
    %v150 = vmax.f32 %v142, 0.0
    %v151 = vmax.f32 %v145, 0.0
    %v152 = vpack.c.bf16 %v149, %v148
    %v153 = vpack.c.bf16 %v151, %v150
    %v154 = vld [vmem:[#allocation7] sm:$0xf]
    %v155 = vld [vmem:[#allocation7 + $0x4] sm:$0xf]
    %v156 = vld [vmem:[#allocation7 + $0x8] sm:$0xf]
    %v157 = vld [vmem:[#allocation7 + $0xc] sm:$0xf]
    %v158 = vld [vmem:[%s4] sm:$0x1]
    %v160 = vlaneseq
    %v161 = vshrl.u32 %v160, 7
    %v162 = vsub.s32 0, %v161
    %v163 = vrot.slane %v158, %v162
    %v169 = vunpack.c.l.b16 %v154
    %v170 = vunpack.c.l.b16 %v155
    %v171 = vunpack.c.l.b16 %v156
    %v172 = vunpack.c.l.b16 %v157
    %v173 = vpack.c.b16 %v170, %v169
    %v174 = vpack.c.b16 %v172, %v171
    %v178 = vsel %vm92, %v152, 0
    %v181 = vsel %vm92, %v153, 0
    %183 = vmatprep.subr.bf16.mxu0 0
    %184 = vmatpush1.bf16.msra.mxu0 %v173
    %185 = vmatprep.subr.bf16.mxu0 0
    %186 = vmatpush1.bf16.msra.mxu0 %v174
    %187 = vmatprep.subr.bf16.mxu0 0
    %188 = vmatpush1.bf16.msra.mxu0 0
    %189 = vmatprep.subr.bf16.mxu0 0
    %190 = vmatpush1.bf16.msra.mxu0 0
    %191 = vmatprep.subr.bf16.mxu0 0
    %192 = vmatpush1.bf16.msra.mxu0 0
    %193 = vmatprep.subr.bf16.mxu0 0
    %194 = vmatpush1.bf16.msra.mxu0 0
    %195 = vmatprep.subr.bf16.mxu0 0
    %196 = vmatpush1.bf16.msra.mxu0 0
    %197 = vmatprep.subr.bf16.mxu0 0
    %198 = vmatpush1.bf16.msra.mxu0 0
    %199 = vmatprep.subr.bf16.mxu0 0
    %200 = vmatpush1.bf16.msra.mxu0 0
    %201 = vmatprep.subr.bf16.mxu0 0
    %202 = vmatpush1.bf16.msra.mxu0 0
    %203 = vmatprep.subr.bf16.mxu0 0
    %204 = vmatpush1.bf16.msra.mxu0 0
    %205 = vmatprep.subr.bf16.mxu0 0
    %206 = vmatpush1.bf16.msra.mxu0 0
    %207 = vmatprep.subr.bf16.mxu0 0
    %208 = vmatpush1.bf16.msra.mxu0 0
    %209 = vmatprep.subr.bf16.mxu0 0
    %210 = vmatpush1.bf16.msra.mxu0 0
    %211 = vmatprep.subr.bf16.mxu0 0
    %212 = vmatpush1.bf16.msra.mxu0 0
    %213 = vmatprep.subr.bf16.mxu0 0
    %214 = vmatpush1.bf16.msra.mxu0 0
    %215 = vmatprep.mubr.bf16.mxu0 0
    %216 = vmatmul.mubr.bf16.gmra.mrb[0].mxu0 %v178
    %v217 = vpop.f32.mrb[0].mxu0
    %v218 = vadd.f32 %v163, %v217
    %v219 = vpop.f32.mrb[0].mxu0
    %v220 = vpop.f32.mrb[0].mxu0
    %v221 = vadd.f32 %v163, %v220
    %v222 = vpop.f32.mrb[0].mxu0
    %223 = vmatprep.mubr.bf16.mxu0 0
    %224 = vmatmul.mubr.bf16.gmra.mrb[0].mxu0 %v181
    %v225 = vpop.f32.mrb[0].mxu0
    %v226 = vadd.f32 %v163, %v225
    %v227 = vpop.f32.mrb[0].mxu0
    %v228 = vpop.f32.mrb[0].mxu0
    %v229 = vadd.f32 %v163, %v228
    %v230 = vpop.f32.mrb[0].mxu0
    %231 = vdwg.mxu0
    %v232 = vmax.f32 %v218, 0.0
    %v233 = vmax.f32 %v221, 0.0
    %v234 = vmax.f32 %v226, 0.0
    %v235 = vmax.f32 %v229, 0.0
    %v236 = vadd.f32 %v232, %v63
    %v237 = vadd.f32 %v233, %v64
    %v238 = vadd.f32 %v234, %v65
    %v239 = vadd.f32 %v235, %v66
    %240 = vst.msk [vmem:[#allocation8] sm:$0xff] %vm92, %v236
    %241 = vst.msk [vmem:[#allocation8 + $0x8] sm:$0xff] %vm92, %v237
    %242 = vst.msk [vmem:[#allocation8 + $0x10] sm:$0xff] %vm92, %v238
    %243 = vst.msk [vmem:[#allocation8 + $0x18] sm:$0xff] %vm92, %v239
    // Predicated region
    $region34: #{tpu_custom_call.1} parent=1 // pred_check
      _
    $region35: #{tpu_custom_call.1} parent=1 // pred_check_branch
      %245 = sbr.rel (0) target = $region37
    $region36: #{tpu_custom_call.1} parent=1 // pred_region
      %s247 = ssub.s32 512, 512
      %248 = vsyncadd [#allocation4], %s247
      %s249 = sshll.u32 [#allocation8], 4
      %s250 = int_to_ptr.vmem [resolvable:$true] %s249
      %255 = dma.vmem_to_hbm [thread:$0]  %s250, 512, %s5, [#allocation4], 128, 128, 8
    $region37: #{tpu_custom_call.1} parent=1 // pred_fallthru
      _
    // Predicated region
    $region38: #{tpu_custom_call.1} parent=1 // pred_check
      _
    $region39: #{tpu_custom_call.1} parent=1 // pred_check_branch
      %257 = sbr.rel (0) target = $region41
    $region40: #{tpu_custom_call.1} parent=1 // pred_region
      %258 = dma.done [#allocation4], 512
    $region41: #{tpu_custom_call.1} parent=1 // pred_fallthru
      _
    %259 = vsyncpa [#allocation3], 1
    %260 = vsyncpa [#allocation6], 1
    %261 = vsyncpa [#allocation4], 1

</llo_original>
